<compile_context>
chip_gen: v7x
topology: tpu7x:2x2x1
jax: 0.10.0
libtpu: 0.0.40
codegen_flags: <defaults>
</compile_context>

<pallas_src>
import functools
import math

import jax
import jax.numpy as jnp
from jax import lax
from jax.experimental import pallas as pl
from jax.experimental.pallas import tpu as pltpu


def _round_up(x: int, m: int) -> int:
    return ((x + m - 1) // m) * m


def _cdiv(a: int, b: int) -> int:
    return (a + b - 1) // b


def _vmem_capacity_bytes() -> int:
    """Per-core physical VMEM (v7x: 64 MiB, v5e/v6e: 128 MiB), clamped to sane bounds."""
    cap = 64 * 1024 * 1024  # conservative default = v7x
    try:
        info = pltpu.get_tpu_info()
        cap = int(getattr(info, "vmem_capacity_bytes", cap))
    except Exception:
        pass
    return max(32 * 1024 * 1024, min(cap, 128 * 1024 * 1024))


# ---------------------------------------------------------------------------
# Path A: VMEM-resident table, one-hot gather on the MXU.
# ---------------------------------------------------------------------------
def _embed_resident_kernel(ids_ref, table_ref, out_ref, *, vocab, chunk, scale):
    """Gather `tile` rows via one-hot matmul against a VMEM-resident table.

    ids_ref:   VMEM (tile, 1) int32  -- this tile's token ids
    table_ref: VMEM (vocab, e_pad)   -- constant index_map => streamed from HBM once
    out_ref:   VMEM (tile, e_pad)    -- lane-dense output block
    """
    ids = ids_ref[...]                                    # (tile, 1) int32
    tile = ids.shape[0]
    e_pad = out_ref.shape[1]
    acc = jnp.zeros((tile, e_pad), jnp.float32)
    # Chunk the vocab axis so the one-hot intermediate stays a few hundred KiB.
    for c in range(_cdiv(vocab, chunk)):
        lo = c * chunk
        cur = min(chunk, vocab - lo)
        iota = lax.broadcasted_iota(jnp.int32, (tile, cur), 1) + lo
        onehot = (ids == iota).astype(table_ref.dtype)    # exactly one 1 per row
        acc = acc + jnp.dot(onehot, table_ref[lo:lo + cur, :],
                            preferred_element_type=jnp.float32)
    # sqrt(embed_dim) scale fused into the store.  (For bf16 tables this scales
    # in f32 then downcasts -> may differ from a pure-bf16 multiply by 1 ulp.)
    out_ref[...] = (acc * scale).astype(out_ref.dtype)


# ---------------------------------------------------------------------------
# Path B: table stays in HBM, manual per-row gather DMAs (huge tables only).
# ---------------------------------------------------------------------------
def _embed_hbm_gather_kernel(ids_ref, table_hbm, out_ref, row_buf, sem, *,
                             tile, n_tiles, scale):
    """Row gather with cross-tile double buffering and one full-slot wait.

    ids_ref:   SMEM (n_pad,) int32   -- scalar-prefetched token ids
    table_hbm: HBM  (vocab, e)       -- raw ref (memory_space=pl.ANY)
    out_ref:   VMEM (tile, e)        -- output block for this token tile
    row_buf:   VMEM (2*tile, e)      -- two gather slots (double buffer)
    sem:       DMA semaphores, one per slot
    """
    i = pl.program_id(0)
    slot = i % 2
    nxt = 1 - slot

    def issue(tile_idx, slot_idx):
        base = tile_idx * tile
        slot_base = slot_idx * tile

        # All SMEM id reads happen before any .wait() (keeps sst->sld forwarding);
        # unrolled so descriptor issue doesn't pay per-iteration branch overhead.
        @pl.loop(0, tile, unroll=True)
        def _issue(t):
            tok = ids_ref[base + t]
            pltpu.make_async_copy(table_hbm.at[tok],
                                  row_buf.at[slot_base + t],
                                  sem.at[slot_idx]).start()

    # Prime the pipeline with this tile's rows on the first grid step.
    @pl.when(i == 0)
    def _():
        issue(0, 0)

    # Prefetch the NEXT tile's rows into the other slot (its ids are already in
    # SMEM), so its gather latency hides behind this tile's compute + writeback.
    @pl.when(i + 1 < n_tiles)
    def _():
        issue(i + 1, nxt)

    # Single full-slot-sized wait: the DMA semaphore counts bytes, and the `tile`
    # row copies into this slot sum to exactly tile * e * itemsize bytes.
    cur = pl.multiple_of(slot * tile, 8)
    pltpu.make_async_copy(table_hbm.at[pl.ds(0, tile)],
                          row_buf.at[pl.ds(cur, tile)],
                          sem.at[slot]).wait()

    rows = row_buf[pl.ds(cur, tile), :]
    out_ref[...] = (rows.astype(jnp.float32) * scale).astype(out_ref.dtype)


# ---------------------------------------------------------------------------
# Wrapper
# ---------------------------------------------------------------------------
def token_embedding_forward(token_ids: jnp.ndarray, table: jnp.ndarray, *,
                            tile_tokens: int = 128,
                            prefer_xla_below_bytes: int = 0,
                            force_path: str | None = None) -> jnp.ndarray:
    """Pallas TPU equivalent of TokenEmbedding.forward.

    token_ids: (batch, seq_len) int
    table:     (vocab_size, embed_dim) float
    returns:   (batch, seq_len, embed_dim) = table[token_ids] * sqrt(embed_dim)
    """
    b, s = token_ids.shape
    v, e = table.shape
    n = b * s
    scale = float(math.sqrt(e))
    itemsize = jnp.dtype(table.dtype).itemsize

    # Clamp ids so an out-of-range id can never become an OOB HBM DMA / gather.
    ids_flat = jnp.clip(token_ids.reshape(-1).astype(jnp.int32), 0, v - 1)

    # Tiny-problem escape hatch: XLA's gather beats any Pallas launch below
    # ~1 MiB of output.  Disabled by default (0) so callers/tests always
    # exercise the kernel; production would pass e.g. 1 << 20.
    if prefer_xla_below_bytes and n * e * itemsize <= prefer_xla_below_bytes:
        out = jnp.take(table, ids_flat, axis=0) * scale
        return out.astype(table.dtype).reshape(b, s, e)

    cap = _vmem_capacity_bytes()
    vmem_limit = min(int(cap * 0.85), 100 * 1024 * 1024)   # 100 MiB on v5e/v6e, ~54 MiB on v7x

    # Token tile: multiple of 8 (sublane), capped so 2x(out block) + 2x(gather
    # slot) = 4*tile*e*itemsize stays <= ~24 MiB even at huge embed_dim (v7x VMEM).
    tile = max(8, _round_up(min(tile_tokens, _round_up(n, 8)), 8))
    tile_cap = max(8, (24 * 1024 * 1024 // max(1, 4 * e * itemsize)) // 8 * 8)
    tile = min(tile, tile_cap)
    # v7x megacore: keep >= 2 grid steps on the 'parallel' token-tile axis when
    # there is enough work, so both TensorCores get a tile.
    if n > 8 and _cdiv(n, tile) < 2:
        tile = max(8, _round_up(_cdiv(n, 2), 8))
    n_pad = _round_up(n, tile)
    n_tiles = n_pad // tile

    if n_pad != n:
        # Pad with id 0 (valid row); padded rows are sliced away below.
        ids_flat = jnp.concatenate([ids_flat, jnp.zeros((n_pad - n,), jnp.int32)])

    # Lane-dense embedding axis for the resident path (unmasked vst stores).
    e_pad = _round_up(e, 128)
    chunk = min(v, 512)
    table_bytes = v * e_pad * itemsize
    resident_need = (2 * table_bytes                    # table (conservatively x2 buffers)
                     + 2 * tile * e_pad * itemsize      # double-buffered out block
                     + tile * (e_pad + chunk) * 4       # f32 acc + one-hot chunk
                     + (2 << 20))                       # headroom
    use_resident = resident_need <= vmem_limit
    if force_path == "resident":
        use_resident = True
    elif force_path == "hbm":
        use_resident = False

    if use_resident:
        # -------- Path A: resident table + one-hot MXU gather --------
        table_p = table if e_pad == e else jnp.pad(table, ((0, 0), (0, e_pad - e)))
        ids_2d = ids_flat.reshape(n_pad, 1)
        kernel = functools.partial(_embed_resident_kernel,
                                   vocab=v, chunk=chunk, scale=scale)
        out = pl.pallas_call(
            kernel,
            out_shape=jax.ShapeDtypeStruct((n_pad, e_pad), table.dtype),
            grid_spec=pltpu.PrefetchScalarGridSpec(
                num_scalar_prefetch=0,
                grid=(n_tiles,),
                in_specs=[
                    pl.BlockSpec((tile, 1), lambda i: (i, 0)),    # this tile's ids
                    pl.BlockSpec((v, e_pad), lambda i: (0, 0)),   # whole table, resident
                ],
                out_specs=pl.BlockSpec((tile, e_pad), lambda i: (i, 0)),
            ),
            compiler_params=pltpu.CompilerParams(
                dimension_semantics=("parallel",),     # independent token tiles
                vmem_limit_bytes=vmem_limit,
            ),
        )(ids_2d, table_p)
        return out[:n, :e].reshape(b, s, e)

    # -------- Path B: HBM table, double-buffered per-row gather DMAs --------
    # TODO(synk): dedupe/sort repeated token ids (or coalesce adjacent ids into
    # one multi-row DMA) in the wrapper to cut descriptor count further.
    kernel = functools.partial(_embed_hbm_gather_kernel,
                               tile=tile, n_tiles=n_tiles, scale=scale)
    out = pl.pallas_call(
        kernel,
        out_shape=jax.ShapeDtypeStruct((n_pad, e), table.dtype),
        grid_spec=pltpu.PrefetchScalarGridSpec(
            num_scalar_prefetch=1,                          # token ids -> SMEM
            grid=(n_tiles,),
            in_specs=[pl.BlockSpec(memory_space=pl.ANY)],   # table stays in HBM
            out_specs=pl.BlockSpec((tile, e), lambda i, ids: (i, 0)),
            scratch_shapes=[
                pltpu.VMEM((2 * tile, e), table.dtype),     # two gather slots
                pltpu.SemaphoreType.DMA((2,)),              # one DMA sem per slot
            ],
        ),
        compiler_params=pltpu.CompilerParams(
            # Cross-step prefetch carries state between consecutive grid steps,
            # so this axis must run sequentially on one core.
            dimension_semantics=("arbitrary",),
            vmem_limit_bytes=vmem_limit,
        ),
    )(ids_flat, table)
    return out[:n].reshape(b, s, e)


if __name__ == "__main__":
    batch, seq_len = 2, 8
    vocab_size, embed_dim = 1024, 128   # small shapes -> resident-table MXU path

    key = jax.random.PRNGKey(0)
    k_ids, k_tab = jax.random.split(key)
    token_ids = jax.random.randint(k_ids, (batch, seq_len), 0, vocab_size,
                                   dtype=jnp.int32)
    table = jax.random.normal(k_tab, (vocab_size, embed_dim), dtype=jnp.float32)

    y = token_embedding_forward(token_ids, table)
    y = jax.block_until_ready(y)

    # Plain-JAX reference of the PyTorch forward.
    y_ref = table[token_ids] * math.sqrt(embed_dim)
    assert y.shape == (batch, seq_len, embed_dim)
    assert jnp.allclose(y, y_ref, atol=1e-5, rtol=1e-5), "mismatch vs reference"

    print("KERNEL_OK")
</pallas_src>

<mosaic_0001>
module attributes {stable_mosaic.version = 11 : i64} {
  func.func @_embed_resident_kernel(%arg0: i32, %arg1: memref<8x1xi32, #tpu.memory_space<vmem>>, %arg2: memref<1024x128xf32, #tpu.memory_space<vmem>>, %arg3: memref<8x128xf32, #tpu.memory_space<vmem>>) attributes {dimension_semantics = [#tpu.dimension_semantics<parallel>], iteration_bounds = array<i64: 2>, scalar_prefetch = 0 : i64, scratch_operands = 0 : i64, tpu.core_type = #tpu.core_type<tc>, window_params = [{transform_indices = @transform_0, window_bounds = array<i64: 8, 1>}, {pipeline_mode = #tpu.pipeline_mode<synchronous>, transform_indices = @transform_1, window_bounds = array<i64: 1024, 128>}, {transform_indices = @transform_2, window_bounds = array<i64: 8, 128>}]} {
    %c0 = arith.constant 0 : index
    %c0_0 = arith.constant 0 : index
    %0 = vector.load %arg1[%c0, %c0_0] : memref<8x1xi32, #tpu.memory_space<vmem>>, vector<8x1xi32>
    %cst = arith.constant 0.000000e+00 : f32
    %1 = vector.broadcast %cst : f32 to vector<8x128xf32>
    %2 = tpu.iota {dimensions = array<i32: 1>} : vector<8x512xi32>
    %c0_i32 = arith.constant 0 : i32
    %3 = vector.broadcast %c0_i32 : i32 to vector<8x512xi32>
    %4 = arith.addi %2, %3 : vector<8x512xi32>
    %5 = vector.broadcast %0 : vector<8x1xi32> to vector<8x512xi32>
    %6 = arith.cmpi eq, %5, %4 : vector<8x512xi32>
    %7 = arith.extui %6 : vector<8x512xi1> to vector<8x512xi32>
    %8 = arith.sitofp %7 : vector<8x512xi32> to vector<8x512xf32>
    %c0_1 = arith.constant 0 : index
    %c0_2 = arith.constant 0 : index
    %9 = vector.load %arg2[%c0_1, %c0_2] : memref<1024x128xf32, #tpu.memory_space<vmem>>, vector<512x128xf32>
    %cst_3 = arith.constant dense<0.000000e+00> : vector<8x128xf32>
    %10 = tpu.matmul %8, %9, %cst_3 {dimension_numbers = #tpu.dot_dimension_numbers<[1], [0], [0], [1], [0, 0, 1, 1], [], []>} : vector<8x512xf32>, vector<512x128xf32>, vector<8x128xf32> -> vector<8x128xf32>
    %11 = arith.addf %1, %10 : vector<8x128xf32>
    %12 = tpu.iota {dimensions = array<i32: 1>} : vector<8x512xi32>
    %c512_i32 = arith.constant 512 : i32
    %13 = vector.broadcast %c512_i32 : i32 to vector<8x512xi32>
    %14 = arith.addi %12, %13 : vector<8x512xi32>
    %15 = vector.broadcast %0 : vector<8x1xi32> to vector<8x512xi32>
    %16 = arith.cmpi eq, %15, %14 : vector<8x512xi32>
    %17 = arith.extui %16 : vector<8x512xi1> to vector<8x512xi32>
    %18 = arith.sitofp %17 : vector<8x512xi32> to vector<8x512xf32>
    %c512 = arith.constant 512 : index
    %c0_4 = arith.constant 0 : index
    %19 = vector.load %arg2[%c512, %c0_4] : memref<1024x128xf32, #tpu.memory_space<vmem>>, vector<512x128xf32>
    %cst_5 = arith.constant dense<0.000000e+00> : vector<8x128xf32>
    %20 = tpu.matmul %18, %19, %cst_5 {dimension_numbers = #tpu.dot_dimension_numbers<[1], [0], [0], [1], [0, 0, 1, 1], [], []>} : vector<8x512xf32>, vector<512x128xf32>, vector<8x128xf32> -> vector<8x128xf32>
    %21 = arith.addf %11, %20 : vector<8x128xf32>
    %cst_6 = arith.constant 11.3137083 : f32
    %22 = vector.broadcast %cst_6 : f32 to vector<8x128xf32>
    %23 = arith.mulf %21, %22 : vector<8x128xf32>
    %c0_7 = arith.constant 0 : index
    %c0_8 = arith.constant 0 : index
    %24 = vector.load %arg3[%c0_7, %c0_8] : memref<8x128xf32, #tpu.memory_space<vmem>>, vector<8x128xf32>
    tpu.vector_store %arg3[%c0_7, %c0_8], %23 {strides = array<i32>} : memref<8x128xf32, #tpu.memory_space<vmem>>, vector<8x128xf32>,
    return
  }
  func.func @transform_0(%arg0: i32) -> (i32, i32) {
    %c0_i32 = arith.constant 0 : i32
    %c0_i32_0 = arith.constant 0 : i32
    return %arg0, %c0_i32 : i32, i32
  }
  func.func @transform_1(%arg0: i32) -> (i32, i32) {
    %c0_i32 = arith.constant 0 : i32
    %c0_i32_0 = arith.constant 0 : i32
    %c0_i32_1 = arith.constant 0 : i32
    return %c0_i32, %c0_i32_0 : i32, i32
  }
  func.func @transform_2(%arg0: i32) -> (i32, i32) {
    %c0_i32 = arith.constant 0 : i32
    %c0_i32_0 = arith.constant 0 : i32
    return %arg0, %c0_i32 : i32, i32
  }
}

</mosaic_0001>

<llo_original>
// kernel: tpu_custom_call.1
$region0: #{tpu_custom_call.1}
  #allocation0 [shape = 'u32[]', space=smem, size = 0x4, offset = 0x4, fixed_abs, tag = 'smem constant byte address 0x4 - core index']
  #allocation1 [shape = 'u32[144,128]{1,0:T(1,128)}', space=vmem, size = 0x12000, scoped, tag = 'internal scratch']
  %s0 = inlined_call_operand.vmem [shape: s32[16,1], index: 0, kind: input, shape index: {}]
  %s1 = inlined_call_operand.hbm [shape: f32[1024,128], index: 1, kind: input, shape index: {}]
  %s2 = inlined_call_operand.hbm [shape: f32[16,128], index: 2, kind: output, shape index: {}]
  %s3 = sld [smem:[#allocation0]]
  $region45: #{tpu_custom_call.1} parent=0
    _
  %s5 = ssub.s32 1, %s3
  %s6 = scalar_select 0, %s5, %s3
  $region1: #{tpu_custom_call.1} parent=0
    #allocation2 [shape = 'u8[524288]{0}', space=vmem, size = 0x80000, scoped, tag = 'input window, operand 1, single buffered']
    #allocation3 [shape = 's32[2]{0}', space=sflag, size = 0x8, scoped, tag = 'scoped memory for tpu_custom_call.1']
    #allocation4 [shape = 's32[2]{0}', space=sflag, size = 0x8, scoped, tag = 'scoped memory for tpu_custom_call.1']
    #allocation5 [shape = 'u8[8192]{0}', space=vmem, size = 0x2000, scoped, tag = 'output window, operand 0']
    %7 = vsyncpa [#allocation3], 0
    %8 = vsyncpa [#allocation4], 0
    %s9 = scalar_lea.sflag [#allocation4], 1
    %10 = vsyncpa %s9, 0
    loop: start=0, step=1, limit=4
    $region2: #{tpu_custom_call.1} parent=1 // loop_pre_header
      _
    $region3: #{tpu_custom_call.1} parent=1 // loop_header
      %s12 = sphi 0, %s16
      %p13 = scmp.ge.s32.totalorder %s12, 4
      %s22 = sphi 0, %s24
      %s25 = sphi 0, %s22
      %s26 = sphi 0, %s25
      %s42 = sphi 0, %s26
      %s46 = sphi 0, %s46
      %s48 = sphi 0, %s46
      %s49 = sphi 0, %s48
      %s63 = sphi 0, %s49
      %s69 = sphi 0, %s71
      %s72 = sphi 0, %s69
      %s73 = sphi 0, %s72
      %s89 = sphi 0, %s73
    $region4: #{tpu_custom_call.1} parent=1 // loop_header_branch
      %15 = sbr.rel (%p13) target = $region8
    $region5: #{tpu_custom_call.1} parent=1 // loop_body
      %s17 = ssub.s32 %s12, 1
      %s18 = ssub.s32 %s12, 2
      %s19 = sadd.s32 %s12, 1
      %s20 = ssub.s32 %s12, %s19
      %p21 = scmp.eq.s32.totalorder %s20, 0
      %s23 = sadd.s32 %s22, 1
      %s24 = scalar_select %p21, %s22, %s23
      %p27 = pneg %p21
      %p28 = scmp.eq.s32.totalorder %s12, 1
      %p29 = por %p27, %p28
      %p30 = scmp.ne.s32.totalorder %s22, %s25
      %p31 = scmp.eq.s32.totalorder %s12, 0
      %p32 = por %p30, %p31
      %p33 = scmp.ne.s32.totalorder %s22, %s25
      %p34 = scmp.eq.s32.totalorder %s17, 1
      %p35 = por %p33, %p34
      %p36 = scmp.ne.s32.totalorder %s25, %s26
      %p37 = scmp.eq.s32.totalorder %s17, 0
      %p38 = por %p36, %p37
      %p39 = scmp.ne.s32.totalorder %s25, %s26
      %p40 = scmp.eq.s32.totalorder %s18, 1
      %p41 = por %p39, %p40
      %p43 = scmp.ne.s32.totalorder %s26, %s42
      %p44 = scmp.eq.s32.totalorder %s18, 0
      %p45 = por %p43, %p44
      %s47 = sadd.s32 %s46, 1
      %p50 = scmp.eq.s32.totalorder %s12, 1
      %p51 = scmp.ne.s32.totalorder %s46, %s48
      %p52 = scmp.eq.s32.totalorder %s12, 0
      %p53 = por %p51, %p52
      %p54 = scmp.ne.s32.totalorder %s46, %s48
      %p55 = scmp.eq.s32.totalorder %s17, 1
      %p56 = por %p54, %p55
      %p57 = scmp.ne.s32.totalorder %s48, %s49
      %p58 = scmp.eq.s32.totalorder %s17, 0
      %p59 = por %p57, %p58
      %p60 = scmp.ne.s32.totalorder %s48, %s49
      %p61 = scmp.eq.s32.totalorder %s18, 1
      %p62 = por %p60, %p61
      %p64 = scmp.ne.s32.totalorder %s49, %s63
      %p65 = scmp.eq.s32.totalorder %s18, 0
      %p66 = por %p64, %p65
      %s67 = ssub.s32 %s12, %s19
      %p68 = scmp.eq.s32.totalorder %s67, 0
      %s70 = sadd.s32 %s69, 1
      %s71 = scalar_select %p68, %s69, %s70
      %p74 = pneg %p68
      %p75 = scmp.eq.s32.totalorder %s12, 1
      %p76 = por %p74, %p75
      %p77 = scmp.ne.s32.totalorder %s69, %s72
      %p78 = scmp.eq.s32.totalorder %s12, 0
      %p79 = por %p77, %p78
      %p80 = scmp.ne.s32.totalorder %s69, %s72
      %p81 = scmp.eq.s32.totalorder %s17, 1
      %p82 = por %p80, %p81
      %p83 = scmp.ne.s32.totalorder %s72, %s73
      %p84 = scmp.eq.s32.totalorder %s17, 0
      %p85 = por %p83, %p84
      %p86 = scmp.ne.s32.totalorder %s72, %s73
      %p87 = scmp.eq.s32.totalorder %s18, 1
      %p88 = por %p86, %p87
      %p90 = scmp.ne.s32.totalorder %s73, %s89
      %p91 = scmp.eq.s32.totalorder %s18, 0
      %p92 = por %p90, %p91
      %p93 = scmp.le.s32.totalorder 1, %s12
      %p94 = scmp.lt.s32.totalorder %s12, 3
      %p95 = pnand %p93, %p94
      %p96 = pneg %p95
      // Predicated region
      $region9: #{tpu_custom_call.1} parent=5 // pred_check
        _
      $region10: #{tpu_custom_call.1} parent=5 // pred_check_branch
        %98 = sbr.rel (%p95) target = $region12
      $region11: #{tpu_custom_call.1} parent=5 // pred_region
        %s99 = ssub.s32 %s12, 1
        // Predicated region
        $region13: #{tpu_custom_call.1} parent=11 // pred_check
          %p100 = pneg %p59
        $region14: #{tpu_custom_call.1} parent=11 // pred_check_branch
          %102 = sbr.rel (%p100) target = $region16
        $region15: #{tpu_custom_call.1} parent=11 // pred_region
          %s104 = ssub.s32 16384, 16384
          %105 = vsyncadd [#allocation3], %s104
          %s106 = sshll.u32 [#allocation2], 4
          %s107 = int_to_ptr.vmem [resolvable:$true] %s106
          %112 = dma.hbm_to_vmem [thread:$0]  %s1, 16384, %s107, [#allocation3], 128, 128, 8
        $region16: #{tpu_custom_call.1} parent=11 // pred_fallthru
          _
      $region12: #{tpu_custom_call.1} parent=5 // pred_fallthru
        _
      %p113 = scmp.lt.s32.totalorder %s12, 2
      // Predicated region
      $region17: #{tpu_custom_call.1} parent=5 // pred_check
        %p114 = pneg %p113
      $region18: #{tpu_custom_call.1} parent=5 // pred_check_branch
        %116 = sbr.rel (%p114) target = $region20
      $region19: #{tpu_custom_call.1} parent=5 // pred_region
        // Predicated region
        $region21: #{tpu_custom_call.1} parent=19 // pred_check
          %p117 = pneg %p32
        $region22: #{tpu_custom_call.1} parent=19 // pred_check_branch
          %119 = sbr.rel (%p117) target = $region24
        $region23: #{tpu_custom_call.1} parent=19 // pred_region
          %p120 = scmp.lt.s32.totalorder %s12, 1
          %s121 = scalar_select %p120, %s12, 1
          %s122 = smul.addr %s121, 8
          %s123 = scalar_lea.vmem %s0, %s122
        $region24: #{tpu_custom_call.1} parent=19 // pred_fallthru
          _
      $region20: #{tpu_custom_call.1} parent=5 // pred_fallthru
        _
      %p124 = scmp.le.s32.totalorder 1, %s12
      %p125 = scmp.lt.s32.totalorder %s12, 3
      %p126 = pnand %p124, %p125
      %p127 = pneg %p126
      // Predicated region
      $region25: #{tpu_custom_call.1} parent=5 // pred_check
        _
      $region26: #{tpu_custom_call.1} parent=5 // pred_check_branch
        %129 = sbr.rel (%p126) target = $region28
      $region27: #{tpu_custom_call.1} parent=5 // pred_region
        %s130 = ssub.s32 %s12, 1
        // Predicated region
        $region29: #{tpu_custom_call.1} parent=27 // pred_check
          %p131 = pneg %p59
        $region30: #{tpu_custom_call.1} parent=27 // pred_check_branch
          %133 = sbr.rel (%p131) target = $region32
        $region31: #{tpu_custom_call.1} parent=27 // pred_region
          %134 = dma.done [#allocation3], 16384
        $region32: #{tpu_custom_call.1} parent=27 // pred_fallthru
          _
        %p135 = scmp.lt.s32.totalorder %s17, 1
        %s136 = scalar_select %p135, %s17, 1
        %s137 = smul.addr %s136, 8
        %s138 = scalar_lea.vmem %s0, %s137
        %p139 = pneg %p38
        %p140 = pneg %p35
        %p141 = pneg %p59
        %p142 = pneg %p56
        %p143 = pneg %p85
        %p144 = pneg %p82
        %s145 = sand.u32 %s72, 1
        %s146 = scalar_lea.sflag [#allocation4], %s145
        %s147 = sand.u32 %s72, 1
        %s148 = smul.addr %s147, 8
        %s149 = scalar_lea.vmem [#allocation5], %s148
        %p150 = scmp.lt.s32.totalorder %s17, 1
        %s151 = scalar_select %p150, %s17, 1
        %s152 = smul.addr %s151, 8
        %s153 = scalar_lea.vmem %s0, %s152
        %v154 = vld [vmem:[%s153] sm:$0xff]
        %v155 = vlaneseq
        %v156 = vand.u32 %v155, 127
        %v157 = vadd.s32 %v156, 128
        %v158 = vadd.s32 %v156, 256
        %v159 = vadd.s32 %v156, 384
        %160 = vset.pattern.permute.xlu0 0
        %161 = vperm.xlu0 %160, %v154
        %v162 = vpop.permute.xlu0 %161
        %vm163 = vcmp.eq.s32.totalorder %v162, %v156
        %vm164 = vcmp.eq.s32.totalorder %v162, %v157
        %vm165 = vcmp.eq.s32.totalorder %v162, %v158
        %vm166 = vcmp.eq.s32.totalorder %v162, %v159
        %v167 = vsel %vm163, 1, 0
        %v168 = vsel %vm164, 1, 0
        %v169 = vsel %vm165, 1, 0
        %v170 = vsel %vm166, 1, 0
        %v171 = vcvt.s32.f32 %v167
        %v172 = vcvt.s32.f32 %v168
        %v173 = vcvt.s32.f32 %v169
        %v174 = vcvt.s32.f32 %v170
        %v175 = vld [vmem:[#allocation2] sm:$0xff]
        %v176 = vld [vmem:[#allocation2 + $0x8] sm:$0xff]
        %v177 = vld [vmem:[#allocation2 + $0x10] sm:$0xff]
        %v178 = vld [vmem:[#allocation2 + $0x18] sm:$0xff]
        %v179 = vld [vmem:[#allocation2 + $0x20] sm:$0xff]
        %v180 = vld [vmem:[#allocation2 + $0x28] sm:$0xff]
        %v181 = vld [vmem:[#allocation2 + $0x30] sm:$0xff]
        %v182 = vld [vmem:[#allocation2 + $0x38] sm:$0xff]
        %v183 = vld [vmem:[#allocation2 + $0x40] sm:$0xff]
        %v184 = vld [vmem:[#allocation2 + $0x48] sm:$0xff]
        %v185 = vld [vmem:[#allocation2 + $0x50] sm:$0xff]
        %v186 = vld [vmem:[#allocation2 + $0x58] sm:$0xff]
        %v187 = vld [vmem:[#allocation2 + $0x60] sm:$0xff]
        %v188 = vld [vmem:[#allocation2 + $0x68] sm:$0xff]
        %v189 = vld [vmem:[#allocation2 + $0x70] sm:$0xff]
        %v190 = vld [vmem:[#allocation2 + $0x78] sm:$0xff]
        %v191 = vld [vmem:[#allocation2 + $0x80] sm:$0xff]
        %v192 = vld [vmem:[#allocation2 + $0x88] sm:$0xff]
        %v193 = vld [vmem:[#allocation2 + $0x90] sm:$0xff]
        %v194 = vld [vmem:[#allocation2 + $0x98] sm:$0xff]
        %v195 = vld [vmem:[#allocation2 + $0xa0] sm:$0xff]
        %v196 = vld [vmem:[#allocation2 + $0xa8] sm:$0xff]
        %v197 = vld [vmem:[#allocation2 + $0xb0] sm:$0xff]
        %v198 = vld [vmem:[#allocation2 + $0xb8] sm:$0xff]
        %v199 = vld [vmem:[#allocation2 + $0xc0] sm:$0xff]
        %v200 = vld [vmem:[#allocation2 + $0xc8] sm:$0xff]
        %v201 = vld [vmem:[#allocation2 + $0xd0] sm:$0xff]
        %v202 = vld [vmem:[#allocation2 + $0xd8] sm:$0xff]
        %v203 = vld [vmem:[#allocation2 + $0xe0] sm:$0xff]
        %v204 = vld [vmem:[#allocation2 + $0xe8] sm:$0xff]
        %v205 = vld [vmem:[#allocation2 + $0xf0] sm:$0xff]
        %v206 = vld [vmem:[#allocation2 + $0xf8] sm:$0xff]
        %v207 = vld [vmem:[#allocation2 + $0x100] sm:$0xff]
        %v208 = vld [vmem:[#allocation2 + $0x108] sm:$0xff]
        %v209 = vld [vmem:[#allocation2 + $0x110] sm:$0xff]
        %v210 = vld [vmem:[#allocation2 + $0x118] sm:$0xff]
        %v211 = vld [vmem:[#allocation2 + $0x120] sm:$0xff]
        %v212 = vld [vmem:[#allocation2 + $0x128] sm:$0xff]
        %v213 = vld [vmem:[#allocation2 + $0x130] sm:$0xff]
        %v214 = vld [vmem:[#allocation2 + $0x138] sm:$0xff]
        %v215 = vld [vmem:[#allocation2 + $0x140] sm:$0xff]
        %v216 = vld [vmem:[#allocation2 + $0x148] sm:$0xff]
        %v217 = vld [vmem:[#allocation2 + $0x150] sm:$0xff]
        %v218 = vld [vmem:[#allocation2 + $0x158] sm:$0xff]
        %v219 = vld [vmem:[#allocation2 + $0x160] sm:$0xff]
        %v220 = vld [vmem:[#allocation2 + $0x168] sm:$0xff]
        %v221 = vld [vmem:[#allocation2 + $0x170] sm:$0xff]
        %v222 = vld [vmem:[#allocation2 + $0x178] sm:$0xff]
        %v223 = vld [vmem:[#allocation2 + $0x180] sm:$0xff]
        %v224 = vld [vmem:[#allocation2 + $0x188] sm:$0xff]
        %v225 = vld [vmem:[#allocation2 + $0x190] sm:$0xff]
        %v226 = vld [vmem:[#allocation2 + $0x198] sm:$0xff]
        %v227 = vld [vmem:[#allocation2 + $0x1a0] sm:$0xff]
        %v228 = vld [vmem:[#allocation2 + $0x1a8] sm:$0xff]
        %v229 = vld [vmem:[#allocation2 + $0x1b0] sm:$0xff]
        %v230 = vld [vmem:[#allocation2 + $0x1b8] sm:$0xff]
        %v231 = vld [vmem:[#allocation2 + $0x1c0] sm:$0xff]
        %v232 = vld [vmem:[#allocation2 + $0x1c8] sm:$0xff]
        %v233 = vld [vmem:[#allocation2 + $0x1d0] sm:$0xff]
        %v234 = vld [vmem:[#allocation2 + $0x1d8] sm:$0xff]
        %v235 = vld [vmem:[#allocation2 + $0x1e0] sm:$0xff]
        %v236 = vld [vmem:[#allocation2 + $0x1e8] sm:$0xff]
        %v237 = vld [vmem:[#allocation2 + $0x1f0] sm:$0xff]
        %v238 = vld [vmem:[#allocation2 + $0x1f8] sm:$0xff]
        %v239 = vadd.s32 %v156, 512
        %v240 = vadd.s32 %v157, 512
        %v241 = vadd.s32 %v158, 512
        %v242 = vadd.s32 %v159, 512
        %vm243 = vcmp.eq.s32.totalorder %v162, %v239
        %vm244 = vcmp.eq.s32.totalorder %v162, %v240
        %vm245 = vcmp.eq.s32.totalorder %v162, %v241
        %vm246 = vcmp.eq.s32.totalorder %v162, %v242
        %v247 = vsel %vm243, 1, 0
        %v248 = vsel %vm244, 1, 0
        %v249 = vsel %vm245, 1, 0
        %v250 = vsel %vm246, 1, 0
        %v251 = vcvt.s32.f32 %v247
        %v252 = vcvt.s32.f32 %v248
        %v253 = vcvt.s32.f32 %v249
        %v254 = vcvt.s32.f32 %v250
        %v255 = vld [vmem:[#allocation2 + $0x200] sm:$0xff]
        %v256 = vld [vmem:[#allocation2 + $0x208] sm:$0xff]
        %v257 = vld [vmem:[#allocation2 + $0x210] sm:$0xff]
        %v258 = vld [vmem:[#allocation2 + $0x218] sm:$0xff]
        %v259 = vld [vmem:[#allocation2 + $0x220] sm:$0xff]
        %v260 = vld [vmem:[#allocation2 + $0x228] sm:$0xff]
        %v261 = vld [vmem:[#allocation2 + $0x230] sm:$0xff]
        %v262 = vld [vmem:[#allocation2 + $0x238] sm:$0xff]
        %v263 = vld [vmem:[#allocation2 + $0x240] sm:$0xff]
        %v264 = vld [vmem:[#allocation2 + $0x248] sm:$0xff]
        %v265 = vld [vmem:[#allocation2 + $0x250] sm:$0xff]
        %v266 = vld [vmem:[#allocation2 + $0x258] sm:$0xff]
        %v267 = vld [vmem:[#allocation2 + $0x260] sm:$0xff]
        %v268 = vld [vmem:[#allocation2 + $0x268] sm:$0xff]
        %v269 = vld [vmem:[#allocation2 + $0x270] sm:$0xff]
        %v270 = vld [vmem:[#allocation2 + $0x278] sm:$0xff]
        %v271 = vld [vmem:[#allocation2 + $0x280] sm:$0xff]
        %v272 = vld [vmem:[#allocation2 + $0x288] sm:$0xff]
        %v273 = vld [vmem:[#allocation2 + $0x290] sm:$0xff]
        %v274 = vld [vmem:[#allocation2 + $0x298] sm:$0xff]
        %v275 = vld [vmem:[#allocation2 + $0x2a0] sm:$0xff]
        %v276 = vld [vmem:[#allocation2 + $0x2a8] sm:$0xff]
        %v277 = vld [vmem:[#allocation2 + $0x2b0] sm:$0xff]
        %v278 = vld [vmem:[#allocation2 + $0x2b8] sm:$0xff]
        %v279 = vld [vmem:[#allocation2 + $0x2c0] sm:$0xff]
        %v280 = vld [vmem:[#allocation2 + $0x2c8] sm:$0xff]
        %v281 = vld [vmem:[#allocation2 + $0x2d0] sm:$0xff]
        %v282 = vld [vmem:[#allocation2 + $0x2d8] sm:$0xff]
        %v283 = vld [vmem:[#allocation2 + $0x2e0] sm:$0xff]
        %v284 = vld [vmem:[#allocation2 + $0x2e8] sm:$0xff]
        %v285 = vld [vmem:[#allocation2 + $0x2f0] sm:$0xff]
        %v286 = vld [vmem:[#allocation2 + $0x2f8] sm:$0xff]
        %v287 = vld [vmem:[#allocation2 + $0x300] sm:$0xff]
        %v288 = vld [vmem:[#allocation2 + $0x308] sm:$0xff]
        %v289 = vld [vmem:[#allocation2 + $0x310] sm:$0xff]
        %v290 = vld [vmem:[#allocation2 + $0x318] sm:$0xff]
        %v291 = vld [vmem:[#allocation2 + $0x320] sm:$0xff]
        %v292 = vld [vmem:[#allocation2 + $0x328] sm:$0xff]
        %v293 = vld [vmem:[#allocation2 + $0x330] sm:$0xff]
        %v294 = vld [vmem:[#allocation2 + $0x338] sm:$0xff]
        %v295 = vld [vmem:[#allocation2 + $0x340] sm:$0xff]
        %v296 = vld [vmem:[#allocation2 + $0x348] sm:$0xff]
        %v297 = vld [vmem:[#allocation2 + $0x350] sm:$0xff]
        %v298 = vld [vmem:[#allocation2 + $0x358] sm:$0xff]
        %v299 = vld [vmem:[#allocation2 + $0x360] sm:$0xff]
        %v300 = vld [vmem:[#allocation2 + $0x368] sm:$0xff]
        %v301 = vld [vmem:[#allocation2 + $0x370] sm:$0xff]
        %v302 = vld [vmem:[#allocation2 + $0x378] sm:$0xff]
        %v303 = vld [vmem:[#allocation2 + $0x380] sm:$0xff]
        %v304 = vld [vmem:[#allocation2 + $0x388] sm:$0xff]
        %v305 = vld [vmem:[#allocation2 + $0x390] sm:$0xff]
        %v306 = vld [vmem:[#allocation2 + $0x398] sm:$0xff]
        %v307 = vld [vmem:[#allocation2 + $0x3a0] sm:$0xff]
        %v308 = vld [vmem:[#allocation2 + $0x3a8] sm:$0xff]
        %v309 = vld [vmem:[#allocation2 + $0x3b0] sm:$0xff]
        %v310 = vld [vmem:[#allocation2 + $0x3b8] sm:$0xff]
        %v311 = vld [vmem:[#allocation2 + $0x3c0] sm:$0xff]
        %v312 = vld [vmem:[#allocation2 + $0x3c8] sm:$0xff]
        %v313 = vld [vmem:[#allocation2 + $0x3d0] sm:$0xff]
        %v314 = vld [vmem:[#allocation2 + $0x3d8] sm:$0xff]
        %v315 = vld [vmem:[#allocation2 + $0x3e0] sm:$0xff]
        %v316 = vld [vmem:[#allocation2 + $0x3e8] sm:$0xff]
        %v317 = vld [vmem:[#allocation2 + $0x3f0] sm:$0xff]
        %v318 = vld [vmem:[#allocation2 + $0x3f8] sm:$0xff]
        %319 = vmatprep.subr.mxu0 0.0
        %320 = vmatpush1.msra.mxu0 %v255
        %321 = vmatprep.subr.mxu0 0.0
        %322 = vmatpush1.msra.mxu0 %v256
        %323 = vmatprep.subr.mxu0 0.0
        %324 = vmatpush1.msra.mxu0 %v257
        %325 = vmatprep.subr.mxu0 0.0
        %326 = vmatpush1.msra.mxu0 %v258
        %327 = vmatprep.subr.mxu0 0.0
        %328 = vmatpush1.msra.mxu0 %v259
        %329 = vmatprep.subr.mxu0 0.0
        %330 = vmatpush1.msra.mxu0 %v260
        %331 = vmatprep.subr.mxu0 0.0
        %332 = vmatpush1.msra.mxu0 %v261
        %333 = vmatprep.subr.mxu0 0.0
        %334 = vmatpush1.msra.mxu0 %v262
        %335 = vmatprep.subr.mxu0 0.0
        %336 = vmatpush1.msra.mxu0 %v263
        %337 = vmatprep.subr.mxu0 0.0
        %338 = vmatpush1.msra.mxu0 %v264
        %339 = vmatprep.subr.mxu0 0.0
        %340 = vmatpush1.msra.mxu0 %v265
        %341 = vmatprep.subr.mxu0 0.0
        %342 = vmatpush1.msra.mxu0 %v266
        %343 = vmatprep.subr.mxu0 0.0
        %344 = vmatpush1.msra.mxu0 %v267
        %345 = vmatprep.subr.mxu0 0.0
        %346 = vmatpush1.msra.mxu0 %v268
        %347 = vmatprep.subr.mxu0 0.0
        %348 = vmatpush1.msra.mxu0 %v269
        %349 = vmatprep.subr.mxu0 0.0
        %350 = vmatpush1.msra.mxu0 %v270
        %351 = vmatprep.subr.mxu0 0.0
        %352 = vmatpush1.msra.mxu0 %v271
        %353 = vmatprep.subr.mxu0 0.0
        %354 = vmatpush1.msra.mxu0 %v272
        %355 = vmatprep.subr.mxu0 0.0
        %356 = vmatpush1.msra.mxu0 %v273
        %357 = vmatprep.subr.mxu0 0.0
        %358 = vmatpush1.msra.mxu0 %v274
        %359 = vmatprep.subr.mxu0 0.0
        %360 = vmatpush1.msra.mxu0 %v275
        %361 = vmatprep.subr.mxu0 0.0
        %362 = vmatpush1.msra.mxu0 %v276
        %363 = vmatprep.subr.mxu0 0.0
        %364 = vmatpush1.msra.mxu0 %v277
        %365 = vmatprep.subr.mxu0 0.0
        %366 = vmatpush1.msra.mxu0 %v278
        %367 = vmatprep.subr.mxu0 0.0
        %368 = vmatpush1.msra.mxu0 %v279
        %369 = vmatprep.subr.mxu0 0.0
        %370 = vmatpush1.msra.mxu0 %v280
        %371 = vmatprep.subr.mxu0 0.0
        %372 = vmatpush1.msra.mxu0 %v281
        %373 = vmatprep.subr.mxu0 0.0
        %374 = vmatpush1.msra.mxu0 %v282
        %375 = vmatprep.subr.mxu0 0.0
        %376 = vmatpush1.msra.mxu0 %v283
        %377 = vmatprep.subr.mxu0 0.0
        %378 = vmatpush1.msra.mxu0 %v284
        %379 = vmatprep.subr.mxu0 0.0
        %380 = vmatpush1.msra.mxu0 %v285
        %381 = vmatprep.subr.mxu0 0.0
        %382 = vmatpush1.msra.mxu0 %v286
        %383 = vmatprep.mubr.f32.mxu0 %v252
        %384 = vmatmul.mubr.f32.gmra.mrb[0].mxu0 %v251
        %v385 = vpop.f32.mrb[0].mxu0
        %v386 = vadd.f32 0.0, %v385
        %v387 = vpop.f32.mrb[0].mxu0
        %388 = vdwg.mxu0
        %389 = vmatprep.subr.mxu0 0.0
        %390 = vmatpush1.msra.mxu0 %v287
        %391 = vmatprep.subr.mxu0 0.0
        %392 = vmatpush1.msra.mxu0 %v288
        %393 = vmatprep.subr.mxu0 0.0
        %394 = vmatpush1.msra.mxu0 %v289
        %395 = vmatprep.subr.mxu0 0.0
        %396 = vmatpush1.msra.mxu0 %v290
        %397 = vmatprep.subr.mxu0 0.0
        %398 = vmatpush1.msra.mxu0 %v291
        %399 = vmatprep.subr.mxu0 0.0
        %400 = vmatpush1.msra.mxu0 %v292
        %401 = vmatprep.subr.mxu0 0.0
        %402 = vmatpush1.msra.mxu0 %v293
        %403 = vmatprep.subr.mxu0 0.0
        %404 = vmatpush1.msra.mxu0 %v294
        %405 = vmatprep.subr.mxu0 0.0
        %406 = vmatpush1.msra.mxu0 %v295
        %407 = vmatprep.subr.mxu0 0.0
        %408 = vmatpush1.msra.mxu0 %v296
        %409 = vmatprep.subr.mxu0 0.0
        %410 = vmatpush1.msra.mxu0 %v297
        %411 = vmatprep.subr.mxu0 0.0
        %412 = vmatpush1.msra.mxu0 %v298
        %413 = vmatprep.subr.mxu0 0.0
        %414 = vmatpush1.msra.mxu0 %v299
        %415 = vmatprep.subr.mxu0 0.0
        %416 = vmatpush1.msra.mxu0 %v300
        %417 = vmatprep.subr.mxu0 0.0
        %418 = vmatpush1.msra.mxu0 %v301
        %419 = vmatprep.subr.mxu0 0.0
        %420 = vmatpush1.msra.mxu0 %v302
        %421 = vmatprep.subr.mxu0 0.0
        %422 = vmatpush1.msra.mxu0 %v303
        %423 = vmatprep.subr.mxu0 0.0
        %424 = vmatpush1.msra.mxu0 %v304
        %425 = vmatprep.subr.mxu0 0.0
        %426 = vmatpush1.msra.mxu0 %v305
        %427 = vmatprep.subr.mxu0 0.0
        %428 = vmatpush1.msra.mxu0 %v306
        %429 = vmatprep.subr.mxu0 0.0
        %430 = vmatpush1.msra.mxu0 %v307
        %431 = vmatprep.subr.mxu0 0.0
        %432 = vmatpush1.msra.mxu0 %v308
        %433 = vmatprep.subr.mxu0 0.0
        %434 = vmatpush1.msra.mxu0 %v309
        %435 = vmatprep.subr.mxu0 0.0
        %436 = vmatpush1.msra.mxu0 %v310
        %437 = vmatprep.subr.mxu0 0.0
        %438 = vmatpush1.msra.mxu0 %v311
        %439 = vmatprep.subr.mxu0 0.0
        %440 = vmatpush1.msra.mxu0 %v312
        %441 = vmatprep.subr.mxu0 0.0
        %442 = vmatpush1.msra.mxu0 %v313
        %443 = vmatprep.subr.mxu0 0.0
        %444 = vmatpush1.msra.mxu0 %v314
        %445 = vmatprep.subr.mxu0 0.0
        %446 = vmatpush1.msra.mxu0 %v315
        %447 = vmatprep.subr.mxu0 0.0
        %448 = vmatpush1.msra.mxu0 %v316
        %449 = vmatprep.subr.mxu0 0.0
        %450 = vmatpush1.msra.mxu0 %v317
        %451 = vmatprep.subr.mxu0 0.0
        %452 = vmatpush1.msra.mxu0 %v318
        %453 = vmatprep.mubr.f32.mxu0 %v254
        %454 = vmatmul.mubr.f32.gmra.mrb[0].mxu0 %v253
        %v455 = vpop.f32.mrb[0].mxu0
        %v456 = vadd.f32 %v386, %v455
        %v457 = vpop.f32.mrb[0].mxu0
        %458 = vdwg.mxu0
        %459 = vmatprep.subr.mxu0 0.0
        %460 = vmatpush1.msra.mxu0 %v175
        %461 = vmatprep.subr.mxu0 0.0
        %462 = vmatpush1.msra.mxu0 %v176
        %463 = vmatprep.subr.mxu0 0.0
        %464 = vmatpush1.msra.mxu0 %v177
        %465 = vmatprep.subr.mxu0 0.0
        %466 = vmatpush1.msra.mxu0 %v178
        %467 = vmatprep.subr.mxu0 0.0
        %468 = vmatpush1.msra.mxu0 %v179
        %469 = vmatprep.subr.mxu0 0.0
        %470 = vmatpush1.msra.mxu0 %v180
        %471 = vmatprep.subr.mxu0 0.0
        %472 = vmatpush1.msra.mxu0 %v181
        %473 = vmatprep.subr.mxu0 0.0
        %474 = vmatpush1.msra.mxu0 %v182
        %475 = vmatprep.subr.mxu0 0.0
        %476 = vmatpush1.msra.mxu0 %v183
        %477 = vmatprep.subr.mxu0 0.0
        %478 = vmatpush1.msra.mxu0 %v184
        %479 = vmatprep.subr.mxu0 0.0
        %480 = vmatpush1.msra.mxu0 %v185
        %481 = vmatprep.subr.mxu0 0.0
        %482 = vmatpush1.msra.mxu0 %v186
        %483 = vmatprep.subr.mxu0 0.0
        %484 = vmatpush1.msra.mxu0 %v187
        %485 = vmatprep.subr.mxu0 0.0
        %486 = vmatpush1.msra.mxu0 %v188
        %487 = vmatprep.subr.mxu0 0.0
        %488 = vmatpush1.msra.mxu0 %v189
        %489 = vmatprep.subr.mxu0 0.0
        %490 = vmatpush1.msra.mxu0 %v190
        %491 = vmatprep.subr.mxu0 0.0
        %492 = vmatpush1.msra.mxu0 %v191
        %493 = vmatprep.subr.mxu0 0.0
        %494 = vmatpush1.msra.mxu0 %v192
        %495 = vmatprep.subr.mxu0 0.0
        %496 = vmatpush1.msra.mxu0 %v193
        %497 = vmatprep.subr.mxu0 0.0
        %498 = vmatpush1.msra.mxu0 %v194
        %499 = vmatprep.subr.mxu0 0.0
        %500 = vmatpush1.msra.mxu0 %v195
        %501 = vmatprep.subr.mxu0 0.0
        %502 = vmatpush1.msra.mxu0 %v196
        %503 = vmatprep.subr.mxu0 0.0
        %504 = vmatpush1.msra.mxu0 %v197
        %505 = vmatprep.subr.mxu0 0.0
        %506 = vmatpush1.msra.mxu0 %v198
        %507 = vmatprep.subr.mxu0 0.0
        %508 = vmatpush1.msra.mxu0 %v199
        %509 = vmatprep.subr.mxu0 0.0
        %510 = vmatpush1.msra.mxu0 %v200
        %511 = vmatprep.subr.mxu0 0.0
        %512 = vmatpush1.msra.mxu0 %v201
        %513 = vmatprep.subr.mxu0 0.0
        %514 = vmatpush1.msra.mxu0 %v202
        %515 = vmatprep.subr.mxu0 0.0
        %516 = vmatpush1.msra.mxu0 %v203
        %517 = vmatprep.subr.mxu0 0.0
        %518 = vmatpush1.msra.mxu0 %v204
        %519 = vmatprep.subr.mxu0 0.0
        %520 = vmatpush1.msra.mxu0 %v205
        %521 = vmatprep.subr.mxu0 0.0
        %522 = vmatpush1.msra.mxu0 %v206
        %523 = vmatprep.mubr.f32.mxu0 %v172
        %524 = vmatmul.mubr.f32.gmra.mrb[0].mxu0 %v171
        %v525 = vpop.f32.mrb[0].mxu0
        %v526 = vadd.f32 %v456, %v525
        %v527 = vpop.f32.mrb[0].mxu0
        %528 = vdwg.mxu0
        %529 = vmatprep.subr.mxu0 0.0
        %530 = vmatpush1.msra.mxu0 %v207
        %531 = vmatprep.subr.mxu0 0.0
        %532 = vmatpush1.msra.mxu0 %v208
        %533 = vmatprep.subr.mxu0 0.0
        %534 = vmatpush1.msra.mxu0 %v209
        %535 = vmatprep.subr.mxu0 0.0
        %536 = vmatpush1.msra.mxu0 %v210
        %537 = vmatprep.subr.mxu0 0.0
        %538 = vmatpush1.msra.mxu0 %v211
        %539 = vmatprep.subr.mxu0 0.0
        %540 = vmatpush1.msra.mxu0 %v212
        %541 = vmatprep.subr.mxu0 0.0
        %542 = vmatpush1.msra.mxu0 %v213
        %543 = vmatprep.subr.mxu0 0.0
        %544 = vmatpush1.msra.mxu0 %v214
        %545 = vmatprep.subr.mxu0 0.0
        %546 = vmatpush1.msra.mxu0 %v215
        %547 = vmatprep.subr.mxu0 0.0
        %548 = vmatpush1.msra.mxu0 %v216
        %549 = vmatprep.subr.mxu0 0.0
        %550 = vmatpush1.msra.mxu0 %v217
        %551 = vmatprep.subr.mxu0 0.0
        %552 = vmatpush1.msra.mxu0 %v218
        %553 = vmatprep.subr.mxu0 0.0
        %554 = vmatpush1.msra.mxu0 %v219
        %555 = vmatprep.subr.mxu0 0.0
        %556 = vmatpush1.msra.mxu0 %v220
        %557 = vmatprep.subr.mxu0 0.0
        %558 = vmatpush1.msra.mxu0 %v221
        %559 = vmatprep.subr.mxu0 0.0
        %560 = vmatpush1.msra.mxu0 %v222
        %561 = vmatprep.subr.mxu0 0.0
        %562 = vmatpush1.msra.mxu0 %v223
        %563 = vmatprep.subr.mxu0 0.0
        %564 = vmatpush1.msra.mxu0 %v224
        %565 = vmatprep.subr.mxu0 0.0
        %566 = vmatpush1.msra.mxu0 %v225
        %567 = vmatprep.subr.mxu0 0.0
        %568 = vmatpush1.msra.mxu0 %v226
        %569 = vmatprep.subr.mxu0 0.0
        %570 = vmatpush1.msra.mxu0 %v227
        %571 = vmatprep.subr.mxu0 0.0
        %572 = vmatpush1.msra.mxu0 %v228
        %573 = vmatprep.subr.mxu0 0.0
        %574 = vmatpush1.msra.mxu0 %v229
        %575 = vmatprep.subr.mxu0 0.0
        %576 = vmatpush1.msra.mxu0 %v230
        %577 = vmatprep.subr.mxu0 0.0
        %578 = vmatpush1.msra.mxu0 %v231
        %579 = vmatprep.subr.mxu0 0.0
        %580 = vmatpush1.msra.mxu0 %v232
        %581 = vmatprep.subr.mxu0 0.0
        %582 = vmatpush1.msra.mxu0 %v233
        %583 = vmatprep.subr.mxu0 0.0
        %584 = vmatpush1.msra.mxu0 %v234
        %585 = vmatprep.subr.mxu0 0.0
        %586 = vmatpush1.msra.mxu0 %v235
        %587 = vmatprep.subr.mxu0 0.0
        %588 = vmatpush1.msra.mxu0 %v236
        %589 = vmatprep.subr.mxu0 0.0
        %590 = vmatpush1.msra.mxu0 %v237
        %591 = vmatprep.subr.mxu0 0.0
        %592 = vmatpush1.msra.mxu0 %v238
        %593 = vmatprep.mubr.f32.mxu0 %v174
        %594 = vmatmul.mubr.f32.gmra.mrb[0].mxu0 %v173
        %v595 = vpop.f32.mrb[0].mxu0
        %v596 = vadd.f32 %v526, %v595
        %v597 = vpop.f32.mrb[0].mxu0
        %598 = vdwg.mxu0
        %v599 = vmul.f32 %v596, 11.313708
        %600 = vst [vmem:[%s149] sm:$0xff] %v599
        %s601 = sand.u32 %s72, 1
        %s602 = scalar_lea.sflag [#allocation4], %s601
        %s603 = sand.u32 %s72, 1
        %s604 = smul.addr %s603, 8
        %s605 = scalar_lea.vmem [#allocation5], %s604
        // Predicated region
        $region33: #{tpu_custom_call.1} parent=27 // pred_check
          %p606 = pneg %p82
        $region34: #{tpu_custom_call.1} parent=27 // pred_check_branch
          %608 = sbr.rel (%p606) target = $region36
        $region35: #{tpu_custom_call.1} parent=27 // pred_region
          %s610 = ssub.s32 128, 128
          %611 = vsyncadd %s602, %s610
          %s612 = smul.addr %s17, 128
          %s613 = scalar_lea.hbm %s2, %s612
          %s615 = sshll.u32 %s605, 4
          %s616 = int_to_ptr.vmem [resolvable:$true] %s615
          %618 = dma.vmem_to_hbm [thread:$0]  %s616, 128, %s613, %s602
        $region36: #{tpu_custom_call.1} parent=27 // pred_fallthru
          _
      $region28: #{tpu_custom_call.1} parent=5 // pred_fallthru
        _
      %p619 = scmp.le.s32.totalorder 2, %s12
      // Predicated region
      $region37: #{tpu_custom_call.1} parent=5 // pred_check
        %p620 = pneg %p619
      $region38: #{tpu_custom_call.1} parent=5 // pred_check_branch
        %622 = sbr.rel (%p620) target = $region40
      $region39: #{tpu_custom_call.1} parent=5 // pred_region
        %s623 = ssub.s32 %s12, 2
        // Predicated region
        $region41: #{tpu_custom_call.1} parent=39 // pred_check
          %p624 = pneg %p88
        $region42: #{tpu_custom_call.1} parent=39 // pred_check_branch
          %626 = sbr.rel (%p624) target = $region44
        $region43: #{tpu_custom_call.1} parent=39 // pred_region
          %s627 = sand.u32 %s73, 1
          %s628 = scalar_lea.sflag [#allocation4], %s627
          %s629 = sand.u32 %s73, 1
          %s630 = smul.addr %s629, 8
          %s631 = scalar_lea.vmem [#allocation5], %s630
          %632 = dma.done %s628, 128
        $region44: #{tpu_custom_call.1} parent=39 // pred_fallthru
          _
      $region40: #{tpu_custom_call.1} parent=5 // pred_fallthru
        _
    $region6: #{tpu_custom_call.1} parent=1 // loop_footer
      %s16 = sadd.s32 1, %s12
    $region7: #{tpu_custom_call.1} parent=1 // loop_footer_branch
      %11 = sbr.rel target = $region3
    $region8: #{tpu_custom_call.1} parent=1 // loop_exit
      _
    %633 = vsyncpa [#allocation3], 1
    %s634 = scalar_lea.sflag [#allocation3], 1
    %635 = vsyncpa %s634, 1
    %636 = vsyncpa [#allocation4], 1
    %s637 = scalar_lea.sflag [#allocation4], 1
    %638 = vsyncpa %s637, 1

</llo_original>
